<compile_context>
chip_gen: v7x
topology: tpu7x:2x2x1
jax: 0.10.0
libtpu: 0.0.40
codegen_flags: <defaults>
</compile_context>

<pallas_src>
import math

import jax
import jax.numpy as jnp
from jax.experimental import pallas as pl
from jax.experimental.pallas import tpu as pltpu


def _round_up(x, m):
    return (x + m - 1) // m * m


def _itemsize(dt):
    return jnp.dtype(dt).itemsize


def _vmem_capacity_bytes():
    """Physical VMEM of this generation (conservative fallback = 64 MiB, v7x)."""
    try:
        info = pltpu.get_tpu_info()
        cap = int(getattr(info, "vmem_capacity_bytes", 0))
        if cap > 0:
            return max(cap, 64 << 20)
    except Exception:
        pass
    return 64 << 20


def _largest_aligned_divisor(total, cap):
    """Largest multiple of 128 dividing `total` (a multiple of 128), <= cap."""
    m = total // 128
    best = 1
    for d in range(1, min(m, max(cap // 128, 1)) + 1):
        if m % d == 0:
            best = d
    return best * 128


# ---------------------------------------------------------------------------
# Stage 1: XW = x @ W  (k-tiled, f32 accumulation, cast to compute dtype)
# ---------------------------------------------------------------------------
def _xw_kernel(x_ref, w_ref, o_ref, acc_ref):
    k = pl.program_id(1)

    @pl.when(k == 0)
    def _init():
        acc_ref[...] = jnp.zeros_like(acc_ref)

    acc_ref[...] += jnp.dot(
        x_ref[...], w_ref[...], preferred_element_type=jnp.float32
    )

    @pl.when(k == pl.num_programs(1) - 1)
    def _finalize():
        o_ref[...] = acc_ref[...].astype(o_ref.dtype)


def _compute_xw(x_pad, w_pad, tm1, tk1, compute_dtype, vmem_limit):
    np_, in_fp = x_pad.shape
    fp = w_pad.shape[1]
    return pl.pallas_call(
        _xw_kernel,
        out_shape=jax.ShapeDtypeStruct((np_, fp), compute_dtype),
        grid=(np_ // tm1, in_fp // tk1),
        in_specs=[
            pl.BlockSpec((tm1, tk1), lambda i, k: (i, k)),
            pl.BlockSpec((tk1, fp), lambda i, k: (k, 0)),
        ],
        out_specs=pl.BlockSpec((tm1, fp), lambda i, k: (i, 0)),
        scratch_shapes=[pltpu.VMEM((tm1, fp), jnp.float32)],
        compiler_params=pltpu.CompilerParams(
            dimension_semantics=("parallel", "arbitrary"),
            vmem_limit_bytes=int(vmem_limit),
        ),
    )(x_pad, w_pad)


# ---------------------------------------------------------------------------
# Stage 2: out = epilogue(adj @ XW)
# ---------------------------------------------------------------------------
def _make_gcn_stream_kernel(has_bias, residual, resident_xw, tk, acc_in_out):
    def kernel(*refs):
        adj_ref, xw_ref = refs[0], refs[1]
        idx = 2
        b_ref = None
        xres_ref = None
        if has_bias:
            b_ref = refs[idx]
            idx += 1
        if residual:
            xres_ref = refs[idx]
            idx += 1
        o_ref = refs[idx]
        acc_ref = o_ref if acc_in_out else refs[idx + 1]

        k = pl.program_id(1)

        @pl.when(k == 0)
        def _init():
            acc_ref[...] = jnp.zeros_like(acc_ref)

        if resident_xw:
            # Whole XW slab lives in VMEM; slice the current k-tile out of it.
            k_start = pl.multiple_of(k * tk, tk)
            xw_tile = xw_ref[pl.ds(k_start, tk), :]
        else:
            xw_tile = xw_ref[...]

        acc_ref[...] += jnp.dot(
            adj_ref[...], xw_tile, preferred_element_type=jnp.float32
        )

        @pl.when(k == pl.num_programs(1) - 1)
        def _finalize():
            out = acc_ref[...].astype(jnp.float32)
            if has_bias:
                out = out + b_ref[...].astype(jnp.float32)
            out = jnp.maximum(out, 0.0)
            if residual:
                out = out + xres_ref[...].astype(jnp.float32)
            o_ref[...] = out.astype(o_ref.dtype)

    return kernel


def _stage2_workset(tm, np_, fp, adj_item, cd_item, out_item,
                    has_bias, residual, resident):
    ws = 2 * tm * tm * adj_item                          # adj tile, dbl-buffered
    ws += 2 * (np_ if resident else tm) * fp * cd_item   # XW slab or k-tile
    ws += tm * fp * 4                                     # f32 accumulator (worst case)
    ws += 2 * tm * fp * out_item                          # output tile
    if has_bias:
        ws += 2 * fp * 4
    if residual:
        ws += 2 * tm * fp * cd_item
    return ws


def _plan_stage2(n, fp, tile, adj_item, cd_item, out_item,
                 has_bias, residual, budget):
    """Pick (tm, np_, resident_xw, workset): biggest VMEM-fitting tile, XW
    resident when it fits."""
    np_ = _round_up(n, 128)
    m = np_ // 128
    cap_d = max(tile // 128, 1)
    cands = [d * 128 for d in range(min(m, cap_d), 0, -1) if m % d == 0]
    xw_resident_ok = 2 * np_ * fp * cd_item <= budget // 2
    for tm in cands:
        for resident in ((True, False) if xw_resident_ok else (False,)):
            ws = _stage2_workset(tm, np_, fp, adj_item, cd_item, out_item,
                                 has_bias, residual, resident)
            if ws <= budget:
                return tm, np_, resident, ws
    tm = cands[-1]  # 128 always divides np_; fall back to the smallest tile.
    return tm, np_, False, _stage2_workset(
        tm, np_, fp, adj_item, cd_item, out_item, has_bias, residual, False)


def prepare_adjacency(adj, *, compute_dtype=jnp.float32):
    """Pad adj to a multiple of 128 and cast once; reuse across GCN layers to
    avoid paying a full HBM pad/cast pass per layer."""
    n = adj.shape[0]
    assert adj.shape == (n, n), "adj must be square"
    np_ = _round_up(n, 128)
    out = adj
    if np_ != n:
        out = jnp.pad(out, ((0, np_ - n), (0, np_ - n)))
    return out.astype(jnp.dtype(compute_dtype))


def graph_convolution(
    x,
    adj,
    weight,
    bias=None,
    residual=True,
    *,
    tile=1024,
    compute_dtype=jnp.float32,
    out_dtype=None,
):
    """Pallas implementation of GraphConvolution.forward(input, adj).

    `adj` may be the raw (n, n) adjacency or a pre-prepared
    `prepare_adjacency(adj, compute_dtype=...)` array (padded + cast once,
    reused across layers).
    """
    n, in_f = x.shape
    assert weight.shape[0] == in_f
    out_f = weight.shape[1]
    has_bias = bias is not None
    if residual:
        assert in_f == out_f, "residual=True requires in_features == out_features"

    out_dtype = x.dtype if out_dtype is None else jnp.dtype(out_dtype)
    cd = jnp.dtype(compute_dtype)
    adj_item = _itemsize(cd)
    cd_item = _itemsize(cd)
    out_item = _itemsize(out_dtype)

    tile = max(128, (int(tile) // 128) * 128)

    cap = _vmem_capacity_bytes()
    budget = max(16 << 20, min(cap // 2, 48 << 20))

    fp = _round_up(out_f, 128)      # lane-dense padded output width
    in_fp = _round_up(in_f, 128)    # lane-dense padded contraction for stage 1

    tm, np_, resident_xw, ws = _plan_stage2(
        n, fp, tile, adj_item, cd_item, out_item, has_bias, residual, budget)
    tk = tm

    # ---- adjacency: only pad/cast when needed; accept pre-prepared adj. ----
    if adj.shape != (n, n):
        assert adj.shape == (np_, np_), (
            f"pre-prepared adj must have shape {(np_, np_)}, got {adj.shape}")
        assert adj.dtype == cd, "pre-prepared adj must be in compute_dtype"
        adj_pad = adj
    elif np_ == n and adj.dtype == cd:
        adj_pad = adj
    else:
        adj_pad = adj
        if np_ != n:
            adj_pad = jnp.pad(adj_pad, ((0, np_ - n), (0, np_ - n)))
        if adj_pad.dtype != cd:
            adj_pad = adj_pad.astype(cd)

    # ---- Stage 1: XW (zero-padded cols/rows are mathematically inert). ----
    if np_ == n and in_fp == in_f:
        x_pad = x
    else:
        x_pad = jnp.pad(x, ((0, np_ - n), (0, in_fp - in_f)))
    if in_fp == in_f and fp == out_f:
        w_pad = weight
    else:
        w_pad = jnp.pad(weight, ((0, in_fp - in_f), (0, fp - out_f)))

    tm1 = _largest_aligned_divisor(np_, min(tm, 512))
    tk1 = _largest_aligned_divisor(in_fp, 512)
    s1_ws = (2 * tm1 * tk1 * 4 + 2 * tk1 * fp * 4
             + tm1 * fp * 4 + 2 * tm1 * fp * cd_item)
    s1_limit = min(cap - (8 << 20), max(32 << 20, s1_ws + (4 << 20)))

    xw = _compute_xw(x_pad, w_pad, tm1, tk1, cd, s1_limit)

    # ---- Stage 2 operands / specs (optional operands only when used). ----
    operands = [adj_pad, xw]
    in_specs = [pl.BlockSpec((tm, tk), lambda i, k: (i, k))]    # streamed adj
    if resident_xw:
        in_specs.append(pl.BlockSpec((np_, fp), lambda i, k: (0, 0)))
    else:
        in_specs.append(pl.BlockSpec((tk, fp), lambda i, k: (k, 0)))

    if has_bias:
        bias_pad = bias.reshape(1, out_f)
        if fp != out_f:
            bias_pad = jnp.pad(bias_pad, ((0, 0), (0, fp - out_f)))
        operands.append(bias_pad.astype(jnp.float32))
        in_specs.append(pl.BlockSpec((1, fp), lambda i, k: (0, 0)))

    if residual:
        if np_ == n and fp == in_f and x.dtype == cd:
            xres = x
        else:
            xres = jnp.pad(x, ((0, np_ - n), (0, fp - in_f))).astype(cd)
        operands.append(xres)
        in_specs.append(pl.BlockSpec((tm, fp), lambda i, k: (i, 0)))

    # f32 outputs accumulate directly into the resident output block.
    acc_in_out = out_dtype == jnp.dtype(jnp.float32)
    scratch_shapes = [] if acc_in_out else [pltpu.VMEM((tm, fp), jnp.float32)]

    kernel = _make_gcn_stream_kernel(has_bias, residual, resident_xw, tk,
                                     acc_in_out)

    row_steps = np_ // tm
    k_steps = np_ // tk
    flops = 2 * np_ * np_ * fp
    bytes_accessed = (np_ * np_ * adj_item
                      + np_ * fp * cd_item * (1 if resident_xw else row_steps)
                      + np_ * fp * out_item
                      + (np_ * fp * cd_item if residual else 0)
                      + (fp * 4 if has_bias else 0))
    s2_limit = min(cap - (8 << 20), max(32 << 20, ws + (4 << 20)))

    out_pad = pl.pallas_call(
        kernel,
        out_shape=jax.ShapeDtypeStruct((np_, fp), out_dtype),
        grid=(row_steps, k_steps),
        in_specs=in_specs,
        out_specs=pl.BlockSpec((tm, fp), lambda i, k: (i, 0)),
        scratch_shapes=scratch_shapes,
        compiler_params=pltpu.CompilerParams(
            dimension_semantics=("parallel", "arbitrary"),
            vmem_limit_bytes=int(s2_limit),
        ),
        cost_estimate=pl.CostEstimate(
            flops=int(flops), transcendentals=0,
            bytes_accessed=int(bytes_accessed)),
    )(*operands)

    return out_pad[:n, :out_f]


def _reference(x, adj, weight, bias, residual=True):
    out = adj @ (x @ weight)
    if bias is not None:
        out = out + bias
    out = jnp.maximum(out, 0.0)
    if residual:
        out = out + x
    return out


if __name__ == "__main__":
    # Small GCN problem: N=8 nodes, in_features = out_features = 32
    N = 8
    IN_F = 32
    OUT_F = 32

    key = jax.random.PRNGKey(0)
    k_x, k_adj, k_w, k_b = jax.random.split(key, 4)

    # Deterministic init mirroring reset_parameters(): uniform(-stdv, stdv)
    stdv = 1.0 / math.sqrt(OUT_F)
    weight = jax.random.uniform(k_w, (IN_F, OUT_F), jnp.float32, -stdv, stdv)
    bias = jax.random.uniform(k_b, (OUT_F,), jnp.float32, -stdv, stdv)

    x = jax.random.normal(k_x, (N, IN_F), dtype=jnp.float32)
    adj_raw = jax.random.uniform(k_adj, (N, N), dtype=jnp.float32)
    adj = adj_raw / jnp.sum(adj_raw, axis=-1, keepdims=True)

    ref = _reference(x, adj, weight, bias, residual=True)

    # 1) Default (exact) path: f32 streaming -> bit-tight parity.
    out_f32 = jax.block_until_ready(
        graph_convolution(x, adj, weight, bias, residual=True))
    assert out_f32.shape == (N, OUT_F)
    assert jnp.allclose(out_f32, ref, atol=1e-5, rtol=1e-5), "f32 path mismatch"

    # 2) Fast path: bf16 adj/XW/residual stream, f32 MXU accumulation.
    out_bf16 = jax.block_until_ready(graph_convolution(
        x, adj, weight, bias, residual=True, compute_dtype=jnp.bfloat16))
    assert jnp.allclose(out_bf16, ref, atol=3e-2, rtol=3e-2), "bf16 path mismatch"

    # 3) bf16 output stores (exercises the explicit f32 accumulator scratch).
    out_bf16_st = jax.block_until_ready(graph_convolution(
        x, adj, weight, bias, residual=True,
        compute_dtype=jnp.bfloat16, out_dtype=jnp.bfloat16))
    assert out_bf16_st.dtype == jnp.bfloat16
    assert jnp.allclose(out_bf16_st.astype(jnp.float32), ref,
                        atol=5e-2, rtol=5e-2), "bf16-store mismatch"

    # 4) No-bias / no-residual variant (operand-free kernel build).
    ref_nr = _reference(x, adj, weight, None, residual=False)
    out_nr = jax.block_until_ready(
        graph_convolution(x, adj, weight, None, residual=False))
    assert jnp.allclose(out_nr, ref_nr, atol=1e-5, rtol=1e-5), "no-bias mismatch"

    # 5) Pre-prepared adjacency reused across two "layers" (amortized pad/cast).
    adj_prep = prepare_adjacency(adj, compute_dtype=jnp.float32)
    h1 = graph_convolution(x, adj_prep, weight, bias, residual=True)
    h2 = jax.block_until_ready(
        graph_convolution(h1, adj_prep, weight, bias, residual=True))
    assert jnp.allclose(h1, ref, atol=1e-5, rtol=1e-5), "prepared-adj mismatch"
    ref2 = _reference(ref, adj, weight, bias, residual=True)
    assert jnp.allclose(h2, ref2, atol=1e-4, rtol=1e-4), "layer-2 mismatch"

    print("KERNEL_OK")
</pallas_src>

<mosaic_0001>
module attributes {stable_mosaic.version = 11 : i64} {
  func.func @_xw_kernel(%arg0: i32, %arg1: i32, %arg2: memref<128x128xf32, #tpu.memory_space<vmem>>, %arg3: memref<128x128xf32, #tpu.memory_space<vmem>>, %arg4: memref<128x128xf32, #tpu.memory_space<vmem>>, %arg5: memref<128x128xf32, #tpu.memory_space<vmem>>) attributes {dimension_semantics = [#tpu.dimension_semantics<parallel>, #tpu.dimension_semantics<arbitrary>], iteration_bounds = array<i64: 1, 1>, scalar_prefetch = 0 : i64, scratch_operands = 1 : i64, tpu.core_type = #tpu.core_type<tc>, window_params = [{transform_indices = @transform_0, window_bounds = array<i64: 128, 128>}, {transform_indices = @transform_1, window_bounds = array<i64: 128, 128>}, {transform_indices = @transform_2, window_bounds = array<i64: 128, 128>}]} {
    %c0_i32 = arith.constant 0 : i32
    %0 = arith.cmpi eq, %arg1, %c0_i32 : i32
    %1 = arith.extui %0 : i1 to i32
    %c0_i32_0 = arith.constant 0 : i32
    %2 = arith.cmpi ne, %1, %c0_i32_0 : i32
    scf.if %2 {
      %cst_10 = arith.constant 0.000000e+00 : f32
      %12 = vector.broadcast %cst_10 : f32 to vector<128x128xf32>
      %c0_11 = arith.constant 0 : index
      %c0_12 = arith.constant 0 : index
      %13 = vector.load %arg5[%c0_11, %c0_12] : memref<128x128xf32, #tpu.memory_space<vmem>>, vector<128x128xf32>
      tpu.vector_store %arg5[%c0_11, %c0_12], %12 {strides = array<i32>} : memref<128x128xf32, #tpu.memory_space<vmem>>, vector<128x128xf32>,
    } else {
    }
    %c0 = arith.constant 0 : index
    %c0_1 = arith.constant 0 : index
    %3 = vector.load %arg5[%c0, %c0_1] : memref<128x128xf32, #tpu.memory_space<vmem>>, vector<128x128xf32>
    %c0_2 = arith.constant 0 : index
    %c0_3 = arith.constant 0 : index
    %4 = vector.load %arg2[%c0_2, %c0_3] : memref<128x128xf32, #tpu.memory_space<vmem>>, vector<128x128xf32>
    %c0_4 = arith.constant 0 : index
    %c0_5 = arith.constant 0 : index
    %5 = vector.load %arg3[%c0_4, %c0_5] : memref<128x128xf32, #tpu.memory_space<vmem>>, vector<128x128xf32>
    %cst = arith.constant dense<0.000000e+00> : vector<128x128xf32>
    %6 = tpu.matmul %4, %5, %cst {dimension_numbers = #tpu.dot_dimension_numbers<[1], [0], [0], [1], [0, 0, 1, 1], [], []>} : vector<128x128xf32>, vector<128x128xf32>, vector<128x128xf32> -> vector<128x128xf32>
    %7 = arith.addf %3, %6 : vector<128x128xf32>
    %c0_6 = arith.constant 0 : index
    %c0_7 = arith.constant 0 : index
    %8 = vector.load %arg5[%c0_6, %c0_7] : memref<128x128xf32, #tpu.memory_space<vmem>>, vector<128x128xf32>
    tpu.vector_store %arg5[%c0_6, %c0_7], %7 {strides = array<i32>} : memref<128x128xf32, #tpu.memory_space<vmem>>, vector<128x128xf32>,
    %c0_i32_8 = arith.constant 0 : i32
    %9 = arith.cmpi eq, %arg1, %c0_i32_8 : i32
    %10 = arith.extui %9 : i1 to i32
    %c0_i32_9 = arith.constant 0 : i32
    %11 = arith.cmpi ne, %10, %c0_i32_9 : i32
    scf.if %11 {
      %c0_10 = arith.constant 0 : index
      %c0_11 = arith.constant 0 : index
      %12 = vector.load %arg5[%c0_10, %c0_11] : memref<128x128xf32, #tpu.memory_space<vmem>>, vector<128x128xf32>
      %c0_12 = arith.constant 0 : index
      %c0_13 = arith.constant 0 : index
      %13 = vector.load %arg4[%c0_12, %c0_13] : memref<128x128xf32, #tpu.memory_space<vmem>>, vector<128x128xf32>
      tpu.vector_store %arg4[%c0_12, %c0_13], %12 {strides = array<i32>} : memref<128x128xf32, #tpu.memory_space<vmem>>, vector<128x128xf32>,
    } else {
    }
    return
  }
  func.func @transform_0(%arg0: i32, %arg1: i32) -> (i32, i32) {
    %c0_i32 = arith.constant 0 : i32
    return %arg0, %arg1 : i32, i32
  }
  func.func @transform_1(%arg0: i32, %arg1: i32) -> (i32, i32) {
    %c0_i32 = arith.constant 0 : i32
    %c0_i32_0 = arith.constant 0 : i32
    return %arg1, %c0_i32 : i32, i32
  }
  func.func @transform_2(%arg0: i32, %arg1: i32) -> (i32, i32) {
    %c0_i32 = arith.constant 0 : i32
    %c0_i32_0 = arith.constant 0 : i32
    return %arg0, %c0_i32 : i32, i32
  }
}

</mosaic_0001>

<llo_original>
// kernel: tpu_custom_call.1
$region0: #{tpu_custom_call.1}
  #allocation0 [shape = 'u32[]', space=smem, size = 0x4, offset = 0x4, fixed_abs, tag = 'smem constant byte address 0x4 - core index']
  #allocation1 [shape = 'u32[144,128]{1,0:T(1,128)}', space=vmem, size = 0x12000, scoped, tag = 'internal scratch']
  #allocation2 [shape = 'f32[128,128]{1,0:T(8,128)}', space=vmem, size = 0x10000, scoped, tag = 'scratch operand']
  %s0 = inlined_call_operand.hbm [shape: f32[128,128], index: 0, kind: input, shape index: {}]
  %s1 = inlined_call_operand.hbm [shape: f32[128,128], index: 1, kind: input, shape index: {}]
  %s2 = inlined_call_operand.hbm [shape: f32[128,128], index: 2, kind: output, shape index: {}]
  %s3 = sld [smem:[#allocation0]]
  $region34: #{tpu_custom_call.1} parent=0
    _
  %s5 = ssub.s32 1, %s3
  %s6 = scalar_select 0, %s5, %s3
  $region1: #{tpu_custom_call.1} parent=0
    #allocation3 [shape = 'u8[65536]{0}', space=vmem, size = 0x10000, scoped, tag = 'input window, operand 0, single buffered']
    #allocation4 [shape = 's32[1]{0}', space=sflag, size = 0x4, scoped, tag = 'scoped memory for tpu_custom_call.1']
    #allocation5 [shape = 's32[1]{0}', space=sflag, size = 0x4, scoped, tag = 'scoped memory for tpu_custom_call.1']
    #allocation6 [shape = 'u8[65536]{0}', space=vmem, size = 0x10000, scoped, tag = 'input window, operand 1, single buffered']
    #allocation7 [shape = 's32[1]{0}', space=sflag, size = 0x4, scoped, tag = 'scoped memory for tpu_custom_call.1']
    #allocation8 [shape = 'u8[65536]{0}', space=vmem, size = 0x10000, scoped, tag = 'output window, operand 0, single buffered']
    %7 = vsyncpa [#allocation4], 0
    %8 = vsyncpa [#allocation7], 0
    %9 = vsyncpa [#allocation5], 0
    // Predicated region
    $region2: #{tpu_custom_call.1} parent=1 // pred_check
      _
    $region3: #{tpu_custom_call.1} parent=1 // pred_check_branch
      %11 = sbr.rel (0) target = $region5
    $region4: #{tpu_custom_call.1} parent=1 // pred_region
      %s13 = ssub.s32 2048, 2048
      %14 = vsyncadd [#allocation4], %s13
      %s15 = sshll.u32 [#allocation3], 4
      %s16 = int_to_ptr.vmem [resolvable:$true] %s15
      %21 = dma.hbm_to_vmem [thread:$0]  %s0, 2048, %s16, [#allocation4], 128, 128, 8
    $region5: #{tpu_custom_call.1} parent=1 // pred_fallthru
      _
    // Predicated region
    $region6: #{tpu_custom_call.1} parent=1 // pred_check
      _
    $region7: #{tpu_custom_call.1} parent=1 // pred_check_branch
      %23 = sbr.rel (0) target = $region9
    $region8: #{tpu_custom_call.1} parent=1 // pred_region
      %s25 = ssub.s32 2048, 2048
      %26 = vsyncadd [#allocation7], %s25
      %s27 = sshll.u32 [#allocation6], 4
      %s28 = int_to_ptr.vmem [resolvable:$true] %s27
      %33 = dma.hbm_to_vmem [thread:$0]  %s1, 2048, %s28, [#allocation7], 128, 128, 8
    $region9: #{tpu_custom_call.1} parent=1 // pred_fallthru
      _
    // Predicated region
    $region10: #{tpu_custom_call.1} parent=1 // pred_check
      _
    $region11: #{tpu_custom_call.1} parent=1 // pred_check_branch
      %35 = sbr.rel (0) target = $region13
    $region12: #{tpu_custom_call.1} parent=1 // pred_region
      %36 = dma.done [#allocation4], 2048
    $region13: #{tpu_custom_call.1} parent=1 // pred_fallthru
      _
    // Predicated region
    $region14: #{tpu_custom_call.1} parent=1 // pred_check
      _
    $region15: #{tpu_custom_call.1} parent=1 // pred_check_branch
      %38 = sbr.rel (0) target = $region17
    $region16: #{tpu_custom_call.1} parent=1 // pred_region
      %39 = dma.done [#allocation7], 2048
    $region17: #{tpu_custom_call.1} parent=1 // pred_fallthru
      _
    %p40 = scmp.eq.s32.totalorder 0, 0
    // Predicated region
    $region18: #{tpu_custom_call.1} parent=1 // pred_check
      %p41 = pneg %p40
    $region19: #{tpu_custom_call.1} parent=1 // pred_check_branch
      %43 = sbr.rel (%p41) target = $region21
    $region20: #{tpu_custom_call.1} parent=1 // pred_region
      %44 = vst [vmem:[#allocation2] sm:$0xff] 0.0
      %45 = vst [vmem:[#allocation2 + $0x8] sm:$0xff] 0.0
      %46 = vst [vmem:[#allocation2 + $0x10] sm:$0xff] 0.0
      %47 = vst [vmem:[#allocation2 + $0x18] sm:$0xff] 0.0
      %48 = vst [vmem:[#allocation2 + $0x20] sm:$0xff] 0.0
      %49 = vst [vmem:[#allocation2 + $0x28] sm:$0xff] 0.0
      %50 = vst [vmem:[#allocation2 + $0x30] sm:$0xff] 0.0
      %51 = vst [vmem:[#allocation2 + $0x38] sm:$0xff] 0.0
      %52 = vst [vmem:[#allocation2 + $0x40] sm:$0xff] 0.0
      %53 = vst [vmem:[#allocation2 + $0x48] sm:$0xff] 0.0
      %54 = vst [vmem:[#allocation2 + $0x50] sm:$0xff] 0.0
      %55 = vst [vmem:[#allocation2 + $0x58] sm:$0xff] 0.0
      %56 = vst [vmem:[#allocation2 + $0x60] sm:$0xff] 0.0
      %57 = vst [vmem:[#allocation2 + $0x68] sm:$0xff] 0.0
      %58 = vst [vmem:[#allocation2 + $0x70] sm:$0xff] 0.0
      %59 = vst [vmem:[#allocation2 + $0x78] sm:$0xff] 0.0
    $region21: #{tpu_custom_call.1} parent=1 // pred_fallthru
      _
    %v60 = vld [vmem:[#allocation2] sm:$0xff]
    %v61 = vld [vmem:[#allocation2 + $0x8] sm:$0xff]
    %v62 = vld [vmem:[#allocation2 + $0x10] sm:$0xff]
    %v63 = vld [vmem:[#allocation2 + $0x18] sm:$0xff]
    %v64 = vld [vmem:[#allocation2 + $0x20] sm:$0xff]
    %v65 = vld [vmem:[#allocation2 + $0x28] sm:$0xff]
    %v66 = vld [vmem:[#allocation2 + $0x30] sm:$0xff]
    %v67 = vld [vmem:[#allocation2 + $0x38] sm:$0xff]
    %v68 = vld [vmem:[#allocation2 + $0x40] sm:$0xff]
    %v69 = vld [vmem:[#allocation2 + $0x48] sm:$0xff]
    %v70 = vld [vmem:[#allocation2 + $0x50] sm:$0xff]
    %v71 = vld [vmem:[#allocation2 + $0x58] sm:$0xff]
    %v72 = vld [vmem:[#allocation2 + $0x60] sm:$0xff]
    %v73 = vld [vmem:[#allocation2 + $0x68] sm:$0xff]
    %v74 = vld [vmem:[#allocation2 + $0x70] sm:$0xff]
    %v75 = vld [vmem:[#allocation2 + $0x78] sm:$0xff]
    %v76 = vld [vmem:[#allocation3] sm:$0xff]
    %v77 = vld [vmem:[#allocation3 + $0x8] sm:$0xff]
    %v78 = vld [vmem:[#allocation3 + $0x10] sm:$0xff]
    %v79 = vld [vmem:[#allocation3 + $0x18] sm:$0xff]
    %v80 = vld [vmem:[#allocation3 + $0x20] sm:$0xff]
    %v81 = vld [vmem:[#allocation3 + $0x28] sm:$0xff]
    %v82 = vld [vmem:[#allocation3 + $0x30] sm:$0xff]
    %v83 = vld [vmem:[#allocation3 + $0x38] sm:$0xff]
    %v84 = vld [vmem:[#allocation3 + $0x40] sm:$0xff]
    %v85 = vld [vmem:[#allocation3 + $0x48] sm:$0xff]
    %v86 = vld [vmem:[#allocation3 + $0x50] sm:$0xff]
    %v87 = vld [vmem:[#allocation3 + $0x58] sm:$0xff]
    %v88 = vld [vmem:[#allocation3 + $0x60] sm:$0xff]
    %v89 = vld [vmem:[#allocation3 + $0x68] sm:$0xff]
    %v90 = vld [vmem:[#allocation3 + $0x70] sm:$0xff]
    %v91 = vld [vmem:[#allocation3 + $0x78] sm:$0xff]
    %v92 = vld [vmem:[#allocation6] sm:$0xff]
    %v93 = vld [vmem:[#allocation6 + $0x8] sm:$0xff]
    %v94 = vld [vmem:[#allocation6 + $0x10] sm:$0xff]
    %v95 = vld [vmem:[#allocation6 + $0x18] sm:$0xff]
    %v96 = vld [vmem:[#allocation6 + $0x20] sm:$0xff]
    %v97 = vld [vmem:[#allocation6 + $0x28] sm:$0xff]
    %v98 = vld [vmem:[#allocation6 + $0x30] sm:$0xff]
    %v99 = vld [vmem:[#allocation6 + $0x38] sm:$0xff]
    %v100 = vld [vmem:[#allocation6 + $0x40] sm:$0xff]
    %v101 = vld [vmem:[#allocation6 + $0x48] sm:$0xff]
    %v102 = vld [vmem:[#allocation6 + $0x50] sm:$0xff]
    %v103 = vld [vmem:[#allocation6 + $0x58] sm:$0xff]
    %v104 = vld [vmem:[#allocation6 + $0x60] sm:$0xff]
    %v105 = vld [vmem:[#allocation6 + $0x68] sm:$0xff]
    %v106 = vld [vmem:[#allocation6 + $0x70] sm:$0xff]
    %v107 = vld [vmem:[#allocation6 + $0x78] sm:$0xff]
    %108 = vmatprep.subr.mxu0 0.0
    %109 = vmatpush1.msra.mxu0 %v92
    %110 = vmatprep.subr.mxu0 0.0
    %111 = vmatpush1.msra.mxu0 %v93
    %112 = vmatprep.subr.mxu0 0.0
    %113 = vmatpush1.msra.mxu0 %v94
    %114 = vmatprep.subr.mxu0 0.0
    %115 = vmatpush1.msra.mxu0 %v95
    %116 = vmatprep.subr.mxu0 0.0
    %117 = vmatpush1.msra.mxu0 %v96
    %118 = vmatprep.subr.mxu0 0.0
    %119 = vmatpush1.msra.mxu0 %v97
    %120 = vmatprep.subr.mxu0 0.0
    %121 = vmatpush1.msra.mxu0 %v98
    %122 = vmatprep.subr.mxu0 0.0
    %123 = vmatpush1.msra.mxu0 %v99
    %124 = vmatprep.subr.mxu0 0.0
    %125 = vmatpush1.msra.mxu0 %v100
    %126 = vmatprep.subr.mxu0 0.0
    %127 = vmatpush1.msra.mxu0 %v101
    %128 = vmatprep.subr.mxu0 0.0
    %129 = vmatpush1.msra.mxu0 %v102
    %130 = vmatprep.subr.mxu0 0.0
    %131 = vmatpush1.msra.mxu0 %v103
    %132 = vmatprep.subr.mxu0 0.0
    %133 = vmatpush1.msra.mxu0 %v104
    %134 = vmatprep.subr.mxu0 0.0
    %135 = vmatpush1.msra.mxu0 %v105
    %136 = vmatprep.subr.mxu0 0.0
    %137 = vmatpush1.msra.mxu0 %v106
    %138 = vmatprep.subr.mxu0 0.0
    %139 = vmatpush1.msra.mxu0 %v107
    %140 = vmatprep.subr.mxu0 0.0
    %141 = vmatpush1.msra.mxu0 0.0
    %142 = vmatprep.subr.mxu0 0.0
    %143 = vmatpush1.msra.mxu0 0.0
    %144 = vmatprep.subr.mxu0 0.0
    %145 = vmatpush1.msra.mxu0 0.0
    %146 = vmatprep.subr.mxu0 0.0
    %147 = vmatpush1.msra.mxu0 0.0
    %148 = vmatprep.subr.mxu0 0.0
    %149 = vmatpush1.msra.mxu0 0.0
    %150 = vmatprep.subr.mxu0 0.0
    %151 = vmatpush1.msra.mxu0 0.0
    %152 = vmatprep.subr.mxu0 0.0
    %153 = vmatpush1.msra.mxu0 0.0
    %154 = vmatprep.subr.mxu0 0.0
    %155 = vmatpush1.msra.mxu0 0.0
    %156 = vmatprep.subr.mxu0 0.0
    %157 = vmatpush1.msra.mxu0 0.0
    %158 = vmatprep.subr.mxu0 0.0
    %159 = vmatpush1.msra.mxu0 0.0
    %160 = vmatprep.subr.mxu0 0.0
    %161 = vmatpush1.msra.mxu0 0.0
    %162 = vmatprep.subr.mxu0 0.0
    %163 = vmatpush1.msra.mxu0 0.0
    %164 = vmatprep.subr.mxu0 0.0
    %165 = vmatpush1.msra.mxu0 0.0
    %166 = vmatprep.subr.mxu0 0.0
    %167 = vmatpush1.msra.mxu0 0.0
    %168 = vmatprep.subr.mxu0 0.0
    %169 = vmatpush1.msra.mxu0 0.0
    %170 = vmatprep.subr.mxu0 0.0
    %171 = vmatpush1.msra.mxu0 0.0
    %172 = vmatprep.mubr.f32.mxu0 0.0
    %173 = vmatmul.mubr.f32.gmra.mrb[0].mxu0 %v76
    %v174 = vpop.f32.mrb[0].mxu0
    %v175 = vadd.f32 0.0, %v174
    %v176 = vpop.f32.mrb[0].mxu0
    %177 = vmatprep.mubr.f32.mxu0 0.0
    %178 = vmatmul.mubr.f32.gmra.mrb[0].mxu0 %v77
    %v179 = vpop.f32.mrb[0].mxu0
    %v180 = vadd.f32 0.0, %v179
    %v181 = vpop.f32.mrb[0].mxu0
    %182 = vmatprep.mubr.f32.mxu0 0.0
    %183 = vmatmul.mubr.f32.gmra.mrb[0].mxu0 %v78
    %v184 = vpop.f32.mrb[0].mxu0
    %v185 = vadd.f32 0.0, %v184
    %v186 = vpop.f32.mrb[0].mxu0
    %187 = vmatprep.mubr.f32.mxu0 0.0
    %188 = vmatmul.mubr.f32.gmra.mrb[0].mxu0 %v79
    %v189 = vpop.f32.mrb[0].mxu0
    %v190 = vadd.f32 0.0, %v189
    %v191 = vpop.f32.mrb[0].mxu0
    %192 = vmatprep.mubr.f32.mxu0 0.0
    %193 = vmatmul.mubr.f32.gmra.mrb[0].mxu0 %v80
    %v194 = vpop.f32.mrb[0].mxu0
    %v195 = vadd.f32 0.0, %v194
    %v196 = vpop.f32.mrb[0].mxu0
    %197 = vmatprep.mubr.f32.mxu0 0.0
    %198 = vmatmul.mubr.f32.gmra.mrb[0].mxu0 %v81
    %v199 = vpop.f32.mrb[0].mxu0
    %v200 = vadd.f32 0.0, %v199
    %v201 = vpop.f32.mrb[0].mxu0
    %202 = vmatprep.mubr.f32.mxu0 0.0
    %203 = vmatmul.mubr.f32.gmra.mrb[0].mxu0 %v82
    %v204 = vpop.f32.mrb[0].mxu0
    %v205 = vadd.f32 0.0, %v204
    %v206 = vpop.f32.mrb[0].mxu0
    %207 = vmatprep.mubr.f32.mxu0 0.0
    %208 = vmatmul.mubr.f32.gmra.mrb[0].mxu0 %v83
    %v209 = vpop.f32.mrb[0].mxu0
    %v210 = vadd.f32 0.0, %v209
    %v211 = vpop.f32.mrb[0].mxu0
    %212 = vmatprep.mubr.f32.mxu0 0.0
    %213 = vmatmul.mubr.f32.gmra.mrb[0].mxu0 %v84
    %v214 = vpop.f32.mrb[0].mxu0
    %v215 = vadd.f32 0.0, %v214
    %v216 = vpop.f32.mrb[0].mxu0
    %217 = vmatprep.mubr.f32.mxu0 0.0
    %218 = vmatmul.mubr.f32.gmra.mrb[0].mxu0 %v85
    %v219 = vpop.f32.mrb[0].mxu0
    %v220 = vadd.f32 0.0, %v219
    %v221 = vpop.f32.mrb[0].mxu0
    %222 = vmatprep.mubr.f32.mxu0 0.0
    %223 = vmatmul.mubr.f32.gmra.mrb[0].mxu0 %v86
    %v224 = vpop.f32.mrb[0].mxu0
    %v225 = vadd.f32 0.0, %v224
    %v226 = vpop.f32.mrb[0].mxu0
    %227 = vmatprep.mubr.f32.mxu0 0.0
    %228 = vmatmul.mubr.f32.gmra.mrb[0].mxu0 %v87
    %v229 = vpop.f32.mrb[0].mxu0
    %v230 = vadd.f32 0.0, %v229
    %v231 = vpop.f32.mrb[0].mxu0
    %232 = vmatprep.mubr.f32.mxu0 0.0
    %233 = vmatmul.mubr.f32.gmra.mrb[0].mxu0 %v88
    %v234 = vpop.f32.mrb[0].mxu0
    %v235 = vadd.f32 0.0, %v234
    %v236 = vpop.f32.mrb[0].mxu0
    %237 = vmatprep.mubr.f32.mxu0 0.0
    %238 = vmatmul.mubr.f32.gmra.mrb[0].mxu0 %v89
    %v239 = vpop.f32.mrb[0].mxu0
    %v240 = vadd.f32 0.0, %v239
    %v241 = vpop.f32.mrb[0].mxu0
    %242 = vmatprep.mubr.f32.mxu0 0.0
    %243 = vmatmul.mubr.f32.gmra.mrb[0].mxu0 %v90
    %v244 = vpop.f32.mrb[0].mxu0
    %v245 = vadd.f32 0.0, %v244
    %v246 = vpop.f32.mrb[0].mxu0
    %247 = vmatprep.mubr.f32.mxu0 0.0
    %248 = vmatmul.mubr.f32.gmra.mrb[0].mxu0 %v91
    %v249 = vpop.f32.mrb[0].mxu0
    %v250 = vadd.f32 0.0, %v249
    %v251 = vpop.f32.mrb[0].mxu0
    %252 = vdwg.mxu0
    %v253 = vadd.f32 %v60, %v175
    %v254 = vadd.f32 %v61, %v180
    %v255 = vadd.f32 %v62, %v185
    %v256 = vadd.f32 %v63, %v190
    %v257 = vadd.f32 %v64, %v195
    %v258 = vadd.f32 %v65, %v200
    %v259 = vadd.f32 %v66, %v205
    %v260 = vadd.f32 %v67, %v210
    %v261 = vadd.f32 %v68, %v215
    %v262 = vadd.f32 %v69, %v220
    %v263 = vadd.f32 %v70, %v225
    %v264 = vadd.f32 %v71, %v230
    %v265 = vadd.f32 %v72, %v235
    %v266 = vadd.f32 %v73, %v240
    %v267 = vadd.f32 %v74, %v245
    %v268 = vadd.f32 %v75, %v250
    %269 = vst [vmem:[#allocation2] sm:$0xff] %v253
    %270 = vst [vmem:[#allocation2 + $0x8] sm:$0xff] %v254
    %271 = vst [vmem:[#allocation2 + $0x10] sm:$0xff] %v255
    %272 = vst [vmem:[#allocation2 + $0x18] sm:$0xff] %v256
    %273 = vst [vmem:[#allocation2 + $0x20] sm:$0xff] %v257
    %274 = vst [vmem:[#allocation2 + $0x28] sm:$0xff] %v258
    %275 = vst [vmem:[#allocation2 + $0x30] sm:$0xff] %v259
    %276 = vst [vmem:[#allocation2 + $0x38] sm:$0xff] %v260
    %277 = vst [vmem:[#allocation2 + $0x40] sm:$0xff] %v261
    %278 = vst [vmem:[#allocation2 + $0x48] sm:$0xff] %v262
    %279 = vst [vmem:[#allocation2 + $0x50] sm:$0xff] %v263
    %280 = vst [vmem:[#allocation2 + $0x58] sm:$0xff] %v264
    %281 = vst [vmem:[#allocation2 + $0x60] sm:$0xff] %v265
    %282 = vst [vmem:[#allocation2 + $0x68] sm:$0xff] %v266
    %283 = vst [vmem:[#allocation2 + $0x70] sm:$0xff] %v267
    %284 = vst [vmem:[#allocation2 + $0x78] sm:$0xff] %v268
    // Predicated region
    $region22: #{tpu_custom_call.1} parent=1 // pred_check
      %p285 = pneg %p40
    $region23: #{tpu_custom_call.1} parent=1 // pred_check_branch
      %287 = sbr.rel (%p285) target = $region25
    $region24: #{tpu_custom_call.1} parent=1 // pred_region
      %v288 = vld [vmem:[#allocation2] sm:$0xff]
      %v289 = vld [vmem:[#allocation2 + $0x8] sm:$0xff]
      %v290 = vld [vmem:[#allocation2 + $0x10] sm:$0xff]
      %v291 = vld [vmem:[#allocation2 + $0x18] sm:$0xff]
      %v292 = vld [vmem:[#allocation2 + $0x20] sm:$0xff]
      %v293 = vld [vmem:[#allocation2 + $0x28] sm:$0xff]
      %v294 = vld [vmem:[#allocation2 + $0x30] sm:$0xff]
      %v295 = vld [vmem:[#allocation2 + $0x38] sm:$0xff]
      %v296 = vld [vmem:[#allocation2 + $0x40] sm:$0xff]
      %v297 = vld [vmem:[#allocation2 + $0x48] sm:$0xff]
      %v298 = vld [vmem:[#allocation2 + $0x50] sm:$0xff]
      %v299 = vld [vmem:[#allocation2 + $0x58] sm:$0xff]
      %v300 = vld [vmem:[#allocation2 + $0x60] sm:$0xff]
      %v301 = vld [vmem:[#allocation2 + $0x68] sm:$0xff]
      %v302 = vld [vmem:[#allocation2 + $0x70] sm:$0xff]
      %v303 = vld [vmem:[#allocation2 + $0x78] sm:$0xff]
      %304 = vst [vmem:[#allocation8] sm:$0xff] %v288
      %305 = vst [vmem:[#allocation8 + $0x8] sm:$0xff] %v289
      %306 = vst [vmem:[#allocation8 + $0x10] sm:$0xff] %v290
      %307 = vst [vmem:[#allocation8 + $0x18] sm:$0xff] %v291
      %308 = vst [vmem:[#allocation8 + $0x20] sm:$0xff] %v292
      %309 = vst [vmem:[#allocation8 + $0x28] sm:$0xff] %v293
      %310 = vst [vmem:[#allocation8 + $0x30] sm:$0xff] %v294
      %311 = vst [vmem:[#allocation8 + $0x38] sm:$0xff] %v295
      %312 = vst [vmem:[#allocation8 + $0x40] sm:$0xff] %v296
      %313 = vst [vmem:[#allocation8 + $0x48] sm:$0xff] %v297
      %314 = vst [vmem:[#allocation8 + $0x50] sm:$0xff] %v298
      %315 = vst [vmem:[#allocation8 + $0x58] sm:$0xff] %v299
      %316 = vst [vmem:[#allocation8 + $0x60] sm:$0xff] %v300
      %317 = vst [vmem:[#allocation8 + $0x68] sm:$0xff] %v301
      %318 = vst [vmem:[#allocation8 + $0x70] sm:$0xff] %v302
      %319 = vst [vmem:[#allocation8 + $0x78] sm:$0xff] %v303
    $region25: #{tpu_custom_call.1} parent=1 // pred_fallthru
      _
    // Predicated region
    $region26: #{tpu_custom_call.1} parent=1 // pred_check
      _
    $region27: #{tpu_custom_call.1} parent=1 // pred_check_branch
      %321 = sbr.rel (0) target = $region29
    $region28: #{tpu_custom_call.1} parent=1 // pred_region
      %s323 = ssub.s32 2048, 2048
      %324 = vsyncadd [#allocation5], %s323
      %s325 = sshll.u32 [#allocation8], 4
      %s326 = int_to_ptr.vmem [resolvable:$true] %s325
      %331 = dma.vmem_to_hbm [thread:$0]  %s326, 2048, %s2, [#allocation5], 128, 128, 8
    $region29: #{tpu_custom_call.1} parent=1 // pred_fallthru
      _
    // Predicated region
    $region30: #{tpu_custom_call.1} parent=1 // pred_check
      _
    $region31: #{tpu_custom_call.1} parent=1 // pred_check_branch
      %333 = sbr.rel (0) target = $region33
    $region32: #{tpu_custom_call.1} parent=1 // pred_region
      %334 = dma.done [#allocation5], 2048
    $region33: #{tpu_custom_call.1} parent=1 // pred_fallthru
      _
    %335 = vsyncpa [#allocation4], 1
    %336 = vsyncpa [#allocation7], 1
    %337 = vsyncpa [#allocation5], 1

</llo_original>
